<compile_context>
chip_gen: v7x
topology: tpu7x:2x2x1
jax: 0.10.0
libtpu: 0.0.40
codegen_flags: <defaults>
</compile_context>

<pallas_src>
import functools

import jax
import jax.numpy as jnp
from jax import lax
from jax.experimental import pallas as pl
from jax.experimental.pallas import tpu as pltpu

_LANE = 128


def _step_topdown_kernel(len_ref, zq_ref, k_ref, v_ref, wk_ref, wa_ref,
                         attn_ref, ctx_ref, *, a_pad, tb, n_key):
    """One grid step processes `tb` batch items at once."""
    df = k_ref.shape[-1]

    # ---- fused gated-tanh projection --------------------------------------
    # One MXU matmul with TB*Nk rows; Wk [Df, 2A] stays VMEM-resident.
    k_flat = k_ref[...].reshape(tb * n_key, df)                     # [TB*Nk, Df]
    z = jnp.dot(k_flat, wk_ref[...], preferred_element_type=jnp.float32)
    # Query projection (with bias folded in) was precomputed per batch item in
    # the wrapper; broadcast it over the key axis instead of materializing the
    # concatenated [key; query] input.
    z = z.reshape(tb, n_key, 2 * a_pad) + zq_ref[...][:, None, :]   # [TB,Nk,2A]

    # a_pad is a multiple of 128 -> both halves are lane-tile-aligned views.
    y = jnp.tanh(z[..., :a_pad])
    # sigmoid(x) = 0.5*tanh(0.5*x) + 0.5 ; the inner 0.5 is folded into the
    # gate half of the fused weights/bias (prepare_params).
    g = 0.5 * jnp.tanh(z[..., a_pad:]) + 0.5
    h = y * g                                                       # [TB,Nk,A]

    # score_bj = w_a . h_bj  (VPU mul + lane reduce; filler under the matmul)
    score = jnp.sum(h * wa_ref[...], axis=-1)                       # [TB, Nk]

    # ---- prefix mask built in-kernel from SMEM lengths (no mask DMA) -------
    base = pl.program_id(0) * tb
    row = lax.broadcasted_iota(jnp.int32, (tb, 1), 0)
    lens = jnp.zeros((tb, 1), jnp.int32)
    for t in range(tb):                     # tb is small: tb scalar SMEM reads
        lens = jnp.where(row == t, len_ref[base + t], lens)
    col = lax.broadcasted_iota(jnp.int32, (tb, n_key), 1)
    score = jnp.where(col < lens, score, jnp.float32(-1e18))

    # ---- softmax along lanes (kept in f32) ---------------------------------
    score = score - jnp.max(score, axis=-1, keepdims=True)
    e = jnp.exp(score)
    s = jnp.sum(e, axis=-1, keepdims=True)
    inv = pl.reciprocal(s, approx=True)     # EUP vrcp instead of VPU divide
    inv = inv * (2.0 - s * inv)             # one Newton step -> ~f32 exact
    attn = e * inv                                                  # [TB, Nk]

    # ---- context = attn @ value (batched MXU matmul) -----------------------
    ctx = jnp.einsum('bqk,bkd->bqd', attn[:, None, :].astype(v_ref.dtype),
                     v_ref[...], preferred_element_type=jnp.float32)

    attn_ref[...] = attn.astype(attn_ref.dtype)
    ctx_ref[...] = ctx[:, 0, :].astype(ctx_ref.dtype)


def prepare_params(w1, b1, w2, b2, w_a, d_feature, *, mxu_dtype=jnp.float32):
    """One-time parameter prep (no per-call transposes in the hot path).

    w1/w2: [d_attn, d_input] (nn.Linear layout), b1/b2: [d_attn], w_a: [d_attn].
    - fuses the two linears into one [d_input, 2*A] matrix,
    - pads d_attn up to a multiple of 128 so the tanh/gate split in the kernel
      is lane-tile aligned (padded columns contribute exactly 0 to the score),
    - folds sigmoid's inner 0.5 scale into the gate half,
    - splits the fused matrix into the key part (Wk, kernel-resident) and the
      query part (Wq, applied once per call in the wrapper).
    Returns (wk [Df,2A], wq [Dq,2A], b_fused [1,2A], wa_row [1,A], a_pad).
    """
    d_attn, _ = w1.shape
    a_pad = ((d_attn + _LANE - 1) // _LANE) * _LANE
    pad = a_pad - d_attn

    w1p = jnp.pad(w1, ((0, pad), (0, 0)))
    b1p = jnp.pad(b1, (0, pad))
    w2p = jnp.pad(w2, ((0, pad), (0, 0))) * 0.5        # fold sigmoid's 0.5
    b2p = jnp.pad(b2, (0, pad)) * 0.5

    w_fused = jnp.concatenate([w1p.T, w2p.T], axis=1)  # [d_input, 2*A]
    wk = w_fused[:d_feature].astype(mxu_dtype)         # key-feature part
    wq = w_fused[d_feature:].astype(mxu_dtype)         # query part (wrapper)
    b_fused = jnp.concatenate([b1p, b2p]).reshape(1, 2 * a_pad).astype(jnp.float32)
    wa_row = jnp.pad(w_a, (0, pad)).reshape(1, a_pad).astype(jnp.float32)
    return wk, wq, b_fused, wa_row, a_pad


def step_top_down_attention(query, key, value, wk, wq, b_fused, wa_row, a_pad,
                            lengths=None, mask=None, *, mxu_dtype=jnp.float32,
                            block_batch=None,
                            vmem_limit_bytes=48 * 1024 * 1024):
    """query [B, Dq], key [B, Nk, Df], value [B, Nk, Dv].

    Masking is expressed as per-batch valid-prefix lengths [B] int32, which are
    scalar-prefetched to SMEM (no mask tensor DMA).
    Returns (attention [B, Nk], context [B, Dv]) in float32.
    """
    B, _ = query.shape
    _, Nk, Df = key.shape
    Dv = value.shape[-1]
    two_a = 2 * a_pad

    if lengths is None:
        if mask is not None:
            # TODO(synk): only prefix-style masks are representable as lengths;
            # arbitrary masks would need a (slower) mask-tensor input path.
            lengths = jnp.sum(mask.astype(jnp.int32), axis=-1)
        else:
            lengths = jnp.full((B,), Nk, jnp.int32)
    lengths = lengths.astype(jnp.int32)

    # Query projection (bias folded in) as ONE dense [B,Dq]@[Dq,2A] matmul in
    # the wrapper: Wq never enters kernel VMEM, and B tiny single-row MXU
    # pushes become a single dense op.
    zq = jnp.dot(query.astype(mxu_dtype), wq,
                 preferred_element_type=jnp.float32) + b_fused       # [B, 2A]

    # TB batch items per grid step: amortize the ~0.35us/step overhead and fill
    # the MXU (target >= 256 rows on v6e/v7x, >= 128 on v5e).
    if block_batch is None:
        block_batch = max(1, min(B, pl.cdiv(256, Nk), 16))
    tb = int(block_batch)
    b_pad = pl.cdiv(B, tb) * tb
    if b_pad != B:
        p = b_pad - B
        zq = jnp.pad(zq, ((0, p), (0, 0)))
        key = jnp.pad(key, ((0, p), (0, 0), (0, 0)))
        value = jnp.pad(value, ((0, p), (0, 0), (0, 0)))
        lengths = jnp.pad(lengths, (0, p), constant_values=Nk)

    key_c = key.astype(mxu_dtype)
    val_c = value.astype(mxu_dtype)
    itemsize = jnp.dtype(mxu_dtype).itemsize

    flops = b_pad * Nk * (2 * Df * two_a + 3 * a_pad + 2 * Dv + 8)
    transcendentals = b_pad * Nk * (two_a + 1)
    bytes_accessed = ((key_c.size + val_c.size + wk.size) * itemsize
                      + 4 * (zq.size + wa_row.size + b_pad * (Nk + Dv + 1)))

    kernel = functools.partial(_step_topdown_kernel, a_pad=a_pad, tb=tb,
                               n_key=Nk)

    # TODO(synk): on v7x, pipeline_mode=pl.Buffered(1) on the resident Wk/w_a
    # specs would drop their redundant second VMEM buffer; omitted here for
    # lowering portability (bf16 weights via mxu_dtype already halve it).
    attn, ctx = pl.pallas_call(
        kernel,
        out_shape=(jax.ShapeDtypeStruct((b_pad, Nk), jnp.float32),
                   jax.ShapeDtypeStruct((b_pad, Dv), jnp.float32)),
        grid_spec=pltpu.PrefetchScalarGridSpec(
            num_scalar_prefetch=1,                         # lengths -> SMEM
            grid=(b_pad // tb,),
            in_specs=[
                pl.BlockSpec((tb, two_a), lambda g, L: (g, 0)),       # zq
                pl.BlockSpec((tb, Nk, Df), lambda g, L: (g, 0, 0)),   # key
                pl.BlockSpec((tb, Nk, Dv), lambda g, L: (g, 0, 0)),   # value
                pl.BlockSpec((Df, two_a), lambda g, L: (0, 0)),       # Wk (resident)
                pl.BlockSpec((1, a_pad), lambda g, L: (0, 0)),        # w_a (resident)
            ],
            out_specs=[
                pl.BlockSpec((tb, Nk), lambda g, L: (g, 0)),          # attention
                pl.BlockSpec((tb, Dv), lambda g, L: (g, 0)),          # context
            ],
        ),
        compiler_params=pltpu.CompilerParams(
            dimension_semantics=("parallel",),
            vmem_limit_bytes=vmem_limit_bytes,
        ),
        cost_estimate=pl.CostEstimate(
            flops=int(flops),
            transcendentals=int(transcendentals),
            bytes_accessed=int(bytes_accessed),
        ),
    )(lengths, zq, key_c, val_c, wk, wa_row)

    return attn[:B], ctx[:B]


def _reference(query, key, value, mask, w1, b1, w2, b2, w_a):
    """Plain-JAX reference with the same (intended) semantics."""
    B, Nk, _ = key.shape
    q_exp = jnp.broadcast_to(query[:, None, :], (B, Nk, query.shape[-1]))
    inp = jnp.concatenate([key, q_exp], axis=-1)             # [B, Nk, Df+Dq]
    y = jnp.tanh(inp @ w1.T + b1)
    g = jax.nn.sigmoid(inp @ w2.T + b2)
    h = y * g                                                # [B, Nk, A]
    score = jnp.einsum('bka,a->bk', h, w_a)                  # [B, Nk]
    score = jnp.where(mask == 0, -1e18, score)
    attn = jax.nn.softmax(score, axis=-1)
    ctx = jnp.einsum('bk,bkd->bd', attn, value)
    return attn, ctx


if __name__ == "__main__":
    rng = jax.random.PRNGKey(0)
    ks = jax.random.split(rng, 8)

    batch, n_key = 2, 8
    d_feature, d_query, d_attn = 32, 32, 32
    d_input = d_feature + d_query

    query = jax.random.normal(ks[0], (batch, d_query), jnp.float32)
    key = jax.random.normal(ks[1], (batch, n_key, d_feature), jnp.float32)
    value = jax.random.normal(ks[2], (batch, n_key, d_feature), jnp.float32)

    # nn.Linear layout: weight [out, in], bias [out]
    w1 = jax.random.normal(ks[3], (d_attn, d_input), jnp.float32) * 0.1
    b1 = jax.random.normal(ks[4], (d_attn,), jnp.float32) * 0.1
    w2 = jax.random.normal(ks[5], (d_attn, d_input), jnp.float32) * 0.1
    b2 = jax.random.normal(ks[6], (d_attn,), jnp.float32) * 0.1
    w_a = jax.random.normal(ks[7], (d_attn,), jnp.float32) * 0.1

    # masking: second batch item only attends to the first 5 keys
    lengths = jnp.array([n_key, 5], jnp.int32)
    mask = (jnp.arange(n_key)[None, :] < lengths[:, None]).astype(jnp.int32)

    wk, wq, b_fused, wa_row, a_pad = prepare_params(w1, b1, w2, b2, w_a,
                                                    d_feature)

    attn, ctx = step_top_down_attention(query, key, value, wk, wq, b_fused,
                                        wa_row, a_pad, lengths=lengths)
    attn, ctx = jax.block_until_ready((attn, ctx))

    attn_ref, ctx_ref = _reference(query, key, value, mask, w1, b1, w2, b2, w_a)

    assert attn.shape == (batch, n_key)
    assert ctx.shape == (batch, d_feature)
    assert jnp.allclose(attn, attn_ref, atol=2e-5, rtol=2e-4), \
        float(jnp.max(jnp.abs(attn - attn_ref)))
    assert jnp.allclose(ctx, ctx_ref, atol=2e-5, rtol=2e-4), \
        float(jnp.max(jnp.abs(ctx - ctx_ref)))
    # masked positions must carry exactly zero attention
    assert float(jnp.max(jnp.abs(attn[1, 5:]))) == 0.0

    print("KERNEL_OK")
</pallas_src>

<mosaic_0001>
module attributes {stable_mosaic.version = 11 : i64} {
  func.func @_step_topdown_kernel(%arg0: i32, %arg1: memref<2xi32, #tpu.memory_space<smem>>, %arg2: memref<2x256xf32, #tpu.memory_space<vmem>>, %arg3: memref<2x8x32xf32, #tpu.memory_space<vmem>>, %arg4: memref<2x8x32xf32, #tpu.memory_space<vmem>>, %arg5: memref<32x256xf32, #tpu.memory_space<vmem>>, %arg6: memref<1x128xf32, #tpu.memory_space<vmem>>, %arg7: memref<2x8xf32, #tpu.memory_space<vmem>>, %arg8: memref<2x32xf32, #tpu.memory_space<vmem>>) attributes {dimension_semantics = [#tpu.dimension_semantics<parallel>], iteration_bounds = array<i64: 1>, scalar_prefetch = 1 : i64, scratch_operands = 0 : i64, tpu.core_type = #tpu.core_type<tc>, window_params = [{transform_indices = @transform_0, window_bounds = array<i64: 2, 256>}, {transform_indices = @transform_1, window_bounds = array<i64: 2, 8, 32>}, {transform_indices = @transform_2, window_bounds = array<i64: 2, 8, 32>}, {pipeline_mode = #tpu.pipeline_mode<synchronous>, transform_indices = @transform_3, window_bounds = array<i64: 32, 256>}, {pipeline_mode = #tpu.pipeline_mode<synchronous>, transform_indices = @transform_4, window_bounds = array<i64: 1, 128>}, {transform_indices = @transform_5, window_bounds = array<i64: 2, 8>}, {transform_indices = @transform_6, window_bounds = array<i64: 2, 32>}]} {
    %c0 = arith.constant 0 : index
    %c0_0 = arith.constant 0 : index
    %c0_1 = arith.constant 0 : index
    %0 = vector.load %arg3[%c0, %c0_0, %c0_1] : memref<2x8x32xf32, #tpu.memory_space<vmem>>, vector<2x8x32xf32>
    %1 = vector.shape_cast %0 : vector<2x8x32xf32> to vector<16x32xf32>
    %c0_2 = arith.constant 0 : index
    %c0_3 = arith.constant 0 : index
    %2 = vector.load %arg5[%c0_2, %c0_3] : memref<32x256xf32, #tpu.memory_space<vmem>>, vector<32x256xf32>
    %cst = arith.constant dense<0.000000e+00> : vector<16x256xf32>
    %3 = tpu.matmul %1, %2, %cst {dimension_numbers = #tpu.dot_dimension_numbers<[1], [0], [0], [1], [0, 0, 1, 1], [], []>} : vector<16x32xf32>, vector<32x256xf32>, vector<16x256xf32> -> vector<16x256xf32>
    %4 = vector.shape_cast %3 : vector<16x256xf32> to vector<2x8x256xf32>
    %c0_4 = arith.constant 0 : index
    %c0_5 = arith.constant 0 : index
    %5 = vector.load %arg2[%c0_4, %c0_5] : memref<2x256xf32, #tpu.memory_space<vmem>>, vector<2x256xf32>
    %6 = vector.shape_cast %5 : vector<2x256xf32> to vector<2x1x256xf32>
    %7 = vector.broadcast %6 : vector<2x1x256xf32> to vector<2x8x256xf32>
    %8 = arith.addf %4, %7 : vector<2x8x256xf32>
    %9 = vector.extract_strided_slice %8 {offsets = [0, 0, 0], sizes = [2, 8, 128], strides = [1, 1, 1]} : vector<2x8x256xf32> to vector<2x8x128xf32>
    %10 = math.tanh %9 : vector<2x8x128xf32>
    %11 = vector.extract_strided_slice %8 {offsets = [0, 0, 128], sizes = [2, 8, 128], strides = [1, 1, 1]} : vector<2x8x256xf32> to vector<2x8x128xf32>
    %12 = math.tanh %11 : vector<2x8x128xf32>
    %cst_6 = arith.constant 5.000000e-01 : f32
    %13 = vector.broadcast %cst_6 : f32 to vector<2x8x128xf32>
    %14 = arith.mulf %13, %12 : vector<2x8x128xf32>
    %cst_7 = arith.constant 5.000000e-01 : f32
    %15 = vector.broadcast %cst_7 : f32 to vector<2x8x128xf32>
    %16 = arith.addf %14, %15 : vector<2x8x128xf32>
    %17 = arith.mulf %10, %16 : vector<2x8x128xf32>
    %c0_8 = arith.constant 0 : index
    %c0_9 = arith.constant 0 : index
    %18 = vector.load %arg6[%c0_8, %c0_9] : memref<1x128xf32, #tpu.memory_space<vmem>>, vector<1x128xf32>
    %19 = vector.shape_cast %18 : vector<1x128xf32> to vector<1x1x128xf32>
    %20 = vector.broadcast %19 : vector<1x1x128xf32> to vector<2x8x128xf32>
    %21 = arith.mulf %17, %20 : vector<2x8x128xf32>
    %cst_10 = arith.constant dense<0.000000e+00> : vector<2x8xf32>
    %22 = vector.multi_reduction <add>, %21, %cst_10 [2] : vector<2x8x128xf32> to vector<2x8xf32>
    %c2_i32 = arith.constant 2 : i32
    %23 = arith.muli %arg0, %c2_i32 : i32
    %24 = tpu.iota {dimensions = array<i32: 0>} : vector<2x1xi32>
    %c0_i32 = arith.constant 0 : i32
    %25 = vector.broadcast %c0_i32 : i32 to vector<2x1xi32>
    %c0_i32_11 = arith.constant 0 : i32
    %26 = vector.broadcast %c0_i32_11 : i32 to vector<2x1xi32>
    %27 = arith.cmpi eq, %24, %26 : vector<2x1xi32>
    %c0_i32_12 = arith.constant 0 : i32
    %28 = arith.addi %23, %c0_i32_12 : i32
    %29 = arith.index_cast %28 : i32 to index
    %30 = memref.load %arg1[%29] : memref<2xi32, #tpu.memory_space<smem>>
    %31 = vector.broadcast %30 : i32 to vector<2x1xi32>
    %32 = arith.select %27, %31, %25 : vector<2x1xi1>, vector<2x1xi32>
    %c1_i32 = arith.constant 1 : i32
    %33 = vector.broadcast %c1_i32 : i32 to vector<2x1xi32>
    %34 = arith.cmpi eq, %24, %33 : vector<2x1xi32>
    %c1_i32_13 = arith.constant 1 : i32
    %35 = arith.addi %23, %c1_i32_13 : i32
    %36 = arith.index_cast %35 : i32 to index
    %37 = memref.load %arg1[%36] : memref<2xi32, #tpu.memory_space<smem>>
    %38 = vector.broadcast %37 : i32 to vector<2x1xi32>
    %39 = arith.select %34, %38, %32 : vector<2x1xi1>, vector<2x1xi32>
    %40 = tpu.iota {dimensions = array<i32: 1>} : vector<2x8xi32>
    %41 = vector.broadcast %39 : vector<2x1xi32> to vector<2x8xi32>
    %42 = arith.cmpi slt, %40, %41 : vector<2x8xi32>
    %cst_14 = arith.constant -9.99999984E+17 : f32
    %43 = vector.broadcast %cst_14 : f32 to vector<2x8xf32>
    %44 = arith.select %42, %22, %43 : vector<2x8xi1>, vector<2x8xf32>
    %cst_15 = arith.constant dense<0xFF800000> : vector<2xf32>
    %45 = vector.multi_reduction <maximumf>, %44, %cst_15 [1] : vector<2x8xf32> to vector<2xf32>
    %46 = vector.shape_cast %45 : vector<2xf32> to vector<2x1xf32>
    %47 = vector.broadcast %46 : vector<2x1xf32> to vector<2x8xf32>
    %48 = arith.subf %44, %47 : vector<2x8xf32>
    %49 = math.exp %48 : vector<2x8xf32>
    %cst_16 = arith.constant dense<0.000000e+00> : vector<2xf32>
    %50 = vector.multi_reduction <add>, %49, %cst_16 [1] : vector<2x8xf32> to vector<2xf32>
    %51 = vector.shape_cast %50 : vector<2xf32> to vector<2x1xf32>
    %52 = tpu.reciprocal %51 {approx = true} : vector<2x1xf32> -> vector<2x1xf32>
    %53 = arith.mulf %51, %52 : vector<2x1xf32>
    %cst_17 = arith.constant 2.000000e+00 : f32
    %54 = vector.broadcast %cst_17 : f32 to vector<2x1xf32>
    %55 = arith.subf %54, %53 : vector<2x1xf32>
    %56 = arith.mulf %52, %55 : vector<2x1xf32>
    %57 = vector.broadcast %56 : vector<2x1xf32> to vector<2x8xf32>
    %58 = arith.mulf %49, %57 : vector<2x8xf32>
    %59 = vector.shape_cast %58 : vector<2x8xf32> to vector<2x1x8xf32>
    %c0_18 = arith.constant 0 : index
    %c0_19 = arith.constant 0 : index
    %c0_20 = arith.constant 0 : index
    %60 = vector.load %arg4[%c0_18, %c0_19, %c0_20] : memref<2x8x32xf32, #tpu.memory_space<vmem>>, vector<2x8x32xf32>
    "tpu.trace_start"() <{level = 10 : i32, message = "bqk,bkd->bqd"}> : () -> ()
    %cst_21 = arith.constant dense<0.000000e+00> : vector<2x1x32xf32>
    %61 = tpu.matmul %59, %60, %cst_21 {dimension_numbers = #tpu.dot_dimension_numbers<[2], [1], [1], [2], [0, 0, 0, 1, 1, 2], [0], [0]>} : vector<2x1x8xf32>, vector<2x8x32xf32>, vector<2x1x32xf32> -> vector<2x1x32xf32>
    "tpu.trace_stop"() : () -> ()
    %c0_22 = arith.constant 0 : index
    %c0_23 = arith.constant 0 : index
    %62 = vector.load %arg7[%c0_22, %c0_23] : memref<2x8xf32, #tpu.memory_space<vmem>>, vector<2x8xf32>
    tpu.vector_store %arg7[%c0_22, %c0_23], %58 {strides = array<i32>} : memref<2x8xf32, #tpu.memory_space<vmem>>, vector<2x8xf32>,
    %63 = vector.shape_cast %61 : vector<2x1x32xf32> to vector<2x32xf32>
    %c0_24 = arith.constant 0 : index
    %c0_25 = arith.constant 0 : index
    %64 = vector.load %arg8[%c0_24, %c0_25] : memref<2x32xf32, #tpu.memory_space<vmem>>, vector<2x32xf32>
    tpu.vector_store %arg8[%c0_24, %c0_25], %63 {strides = array<i32>} : memref<2x32xf32, #tpu.memory_space<vmem>>, vector<2x32xf32>,
    return
  }
  func.func @transform_0(%arg0: i32, %arg1: memref<2xi32, #tpu.memory_space<smem>>) -> (i32, i32) {
    %c0_i32 = arith.constant 0 : i32
    %c0_i32_0 = arith.constant 0 : i32
    return %arg0, %c0_i32 : i32, i32
  }
  func.func @transform_1(%arg0: i32, %arg1: memref<2xi32, #tpu.memory_space<smem>>) -> (i32, i32, i32) {
    %c0_i32 = arith.constant 0 : i32
    %c0_i32_0 = arith.constant 0 : i32
    %c0_i32_1 = arith.constant 0 : i32
    return %arg0, %c0_i32, %c0_i32_0 : i32, i32, i32
  }
  func.func @transform_2(%arg0: i32, %arg1: memref<2xi32, #tpu.memory_space<smem>>) -> (i32, i32, i32) {
    %c0_i32 = arith.constant 0 : i32
    %c0_i32_0 = arith.constant 0 : i32
    %c0_i32_1 = arith.constant 0 : i32
    return %arg0, %c0_i32, %c0_i32_0 : i32, i32, i32
  }
  func.func @transform_3(%arg0: i32, %arg1: memref<2xi32, #tpu.memory_space<smem>>) -> (i32, i32) {
    %c0_i32 = arith.constant 0 : i32
    %c0_i32_0 = arith.constant 0 : i32
    %c0_i32_1 = arith.constant 0 : i32
    return %c0_i32, %c0_i32_0 : i32, i32
  }
  func.func @transform_4(%arg0: i32, %arg1: memref<2xi32, #tpu.memory_space<smem>>) -> (i32, i32) {
    %c0_i32 = arith.constant 0 : i32
    %c0_i32_0 = arith.constant 0 : i32
    %c0_i32_1 = arith.constant 0 : i32
    return %c0_i32, %c0_i32_0 : i32, i32
  }
  func.func @transform_5(%arg0: i32, %arg1: memref<2xi32, #tpu.memory_space<smem>>) -> (i32, i32) {
    %c0_i32 = arith.constant 0 : i32
    %c0_i32_0 = arith.constant 0 : i32
    return %arg0, %c0_i32 : i32, i32
  }
  func.func @transform_6(%arg0: i32, %arg1: memref<2xi32, #tpu.memory_space<smem>>) -> (i32, i32) {
    %c0_i32 = arith.constant 0 : i32
    %c0_i32_0 = arith.constant 0 : i32
    return %arg0, %c0_i32 : i32, i32
  }
}

</mosaic_0001>

<llo_original>
// kernel: tpu_custom_call.1
$region0: #{tpu_custom_call.1}
  #allocation0 [shape = 'u32[]', space=smem, size = 0x4, offset = 0x4, fixed_abs, tag = 'smem constant byte address 0x4 - core index']
  #allocation1 [shape = 'u32[144,128]{1,0:T(1,128)}', space=vmem, size = 0x12000, scoped, tag = 'internal scratch']
  #allocation2 [shape = 's32[1]{0}', space=sflag, size = 0x4, scoped, tag = 'scoped memory for tpu_custom_call.1']
  #allocation3 [shape = 'u8[512]{0}', space=smem, size = 0x200, scoped, tag = 'prefetched SMEM operand 0']
  %s0 = inlined_call_operand.hbm [shape: s32[2], index: 0, kind: input, shape index: {}]
  %s1 = inlined_call_operand.hbm [shape: f32[2,256], index: 1, kind: input, shape index: {}]
  %s2 = inlined_call_operand.hbm [shape: f32[2,8,32], index: 2, kind: input, shape index: {}]
  %s3 = inlined_call_operand.hbm [shape: f32[2,8,32], index: 3, kind: input, shape index: {}]
  %s4 = inlined_call_operand.hbm [shape: f32[32,256], index: 4, kind: input, shape index: {}]
  %s5 = inlined_call_operand.vmem [shape: f32[1,128], index: 5, kind: input, shape index: {}]
  %s6 = inlined_call_operand.hbm [shape: f32[2,8], index: 6, kind: output, shape index: {0}]
  %s7 = inlined_call_operand.hbm [shape: f32[2,32], index: 7, kind: output, shape index: {1}]
  %8 = xla_tuple %s6, %s7
  %s9 = sld [smem:[#allocation0]]
  $region54: #{tpu_custom_call.1} parent=0
    _
  %s11 = ssub.s32 1, %s9
  %s12 = scalar_select 0, %s11, %s9
  %14 = dma.hbm_to_smem %s0, 16, [#allocation3], [#allocation2]
  %15 = dma.done [#allocation2], 16
  %16 = sfence
  $region1: #{tpu_custom_call.1} parent=0
    #allocation4 [shape = 'u8[2048]{0}', space=vmem, size = 0x800, scoped, tag = 'input window, operand 1, single buffered']
    #allocation5 [shape = 's32[1]{0}', space=sflag, size = 0x4, scoped, tag = 'scoped memory for tpu_custom_call.1']
    #allocation6 [shape = 's32[1]{0}', space=sflag, size = 0x4, scoped, tag = 'scoped memory for tpu_custom_call.1']
    #allocation7 [shape = 'u8[8192]{0}', space=vmem, size = 0x2000, scoped, tag = 'input window, operand 2, single buffered']
    #allocation8 [shape = 's32[1]{0}', space=sflag, size = 0x4, scoped, tag = 'scoped memory for tpu_custom_call.1']
    #allocation9 [shape = 'u8[8192]{0}', space=vmem, size = 0x2000, scoped, tag = 'input window, operand 3, single buffered']
    #allocation10 [shape = 'u8[32768]{0}', space=vmem, size = 0x8000, scoped, tag = 'input window, operand 4, single buffered']
    #allocation11 [shape = 's32[1]{0}', space=sflag, size = 0x4, scoped, tag = 'scoped memory for tpu_custom_call.1']
    #allocation12 [shape = 'u8[1024]{0}', space=vmem, size = 0x400, scoped, tag = 'output window, operand 0, single buffered']
    #allocation13 [shape = 'u8[1024]{0}', space=vmem, size = 0x400, scoped, tag = 'output window, operand 1, single buffered']
    #allocation14 [shape = 's32[1]{0}', space=sflag, size = 0x4, scoped, tag = 'scoped memory for tpu_custom_call.1']
    %17 = vsyncpa [#allocation5], 0
    %18 = vsyncpa [#allocation8], 0
    %19 = vsyncpa [#allocation11], 0
    %20 = vsyncpa [#allocation6], 0
    %21 = vsyncpa [#allocation14], 0
    // Predicated region
    $region2: #{tpu_custom_call.1} parent=1 // pred_check
      _
    $region3: #{tpu_custom_call.1} parent=1 // pred_check_branch
      %23 = sbr.rel (0) target = $region5
    $region4: #{tpu_custom_call.1} parent=1 // pred_region
      %s25 = ssub.s32 64, 64
      %26 = vsyncadd [#allocation5], %s25
      %s28 = sshll.u32 [#allocation4], 4
      %s29 = int_to_ptr.vmem [resolvable:$true] %s28
      %31 = dma.hbm_to_vmem [thread:$0]  %s1, 64, %s29, [#allocation5]
    $region5: #{tpu_custom_call.1} parent=1 // pred_fallthru
      _
    // Predicated region
    $region6: #{tpu_custom_call.1} parent=1 // pred_check
      _
    $region7: #{tpu_custom_call.1} parent=1 // pred_check_branch
      %33 = sbr.rel (0) target = $region9
    $region8: #{tpu_custom_call.1} parent=1 // pred_region
      %s35 = ssub.s32 256, 256
      %36 = vsyncadd [#allocation8], %s35
      %s37 = sshll.u32 [#allocation7], 4
      %s38 = int_to_ptr.vmem [resolvable:$true] %s37
      %43 = dma.hbm_to_vmem [thread:$0]  %s2, 256, %s38, [#allocation8], 128, 128, 8
    $region9: #{tpu_custom_call.1} parent=1 // pred_fallthru
      _
    // Predicated region
    $region10: #{tpu_custom_call.1} parent=1 // pred_check
      _
    $region11: #{tpu_custom_call.1} parent=1 // pred_check_branch
      %45 = sbr.rel (0) target = $region13
    $region12: #{tpu_custom_call.1} parent=1 // pred_region
      %s47 = ssub.s32 256, 256
      %48 = vsyncadd [#allocation8], %s47
      %s49 = sshll.u32 [#allocation9], 4
      %s50 = int_to_ptr.vmem [resolvable:$true] %s49
      %55 = dma.hbm_to_vmem [thread:$0]  %s3, 256, %s50, [#allocation8], 128, 128, 8
    $region13: #{tpu_custom_call.1} parent=1 // pred_fallthru
      _
    // Predicated region
    $region14: #{tpu_custom_call.1} parent=1 // pred_check
      _
    $region15: #{tpu_custom_call.1} parent=1 // pred_check_branch
      %57 = sbr.rel (0) target = $region17
    $region16: #{tpu_custom_call.1} parent=1 // pred_region
      %s59 = ssub.s32 1024, 1024
      %60 = vsyncadd [#allocation11], %s59
      %s61 = sshll.u32 [#allocation10], 4
      %s62 = int_to_ptr.vmem [resolvable:$true] %s61
      %67 = dma.hbm_to_vmem [thread:$0]  %s4, 1024, %s62, [#allocation11], 256, 256, 16
    $region17: #{tpu_custom_call.1} parent=1 // pred_fallthru
      _
    // Predicated region
    $region18: #{tpu_custom_call.1} parent=1 // pred_check
      _
    $region19: #{tpu_custom_call.1} parent=1 // pred_check_branch
      %69 = sbr.rel (0) target = $region21
    $region20: #{tpu_custom_call.1} parent=1 // pred_region
      _
    $region21: #{tpu_custom_call.1} parent=1 // pred_fallthru
      _
    // Predicated region
    $region22: #{tpu_custom_call.1} parent=1 // pred_check
      _
    $region23: #{tpu_custom_call.1} parent=1 // pred_check_branch
      %71 = sbr.rel (0) target = $region25
    $region24: #{tpu_custom_call.1} parent=1 // pred_region
      %72 = dma.done [#allocation5], 64
    $region25: #{tpu_custom_call.1} parent=1 // pred_fallthru
      _
    // Predicated region
    $region26: #{tpu_custom_call.1} parent=1 // pred_check
      _
    $region27: #{tpu_custom_call.1} parent=1 // pred_check_branch
      %74 = sbr.rel (0) target = $region29
    $region28: #{tpu_custom_call.1} parent=1 // pred_region
      %75 = dma.done [#allocation8], 256
    $region29: #{tpu_custom_call.1} parent=1 // pred_fallthru
      _
    // Predicated region
    $region30: #{tpu_custom_call.1} parent=1 // pred_check
      _
    $region31: #{tpu_custom_call.1} parent=1 // pred_check_branch
      %77 = sbr.rel (0) target = $region33
    $region32: #{tpu_custom_call.1} parent=1 // pred_region
      %78 = dma.done [#allocation8], 256
    $region33: #{tpu_custom_call.1} parent=1 // pred_fallthru
      _
    // Predicated region
    $region34: #{tpu_custom_call.1} parent=1 // pred_check
      _
    $region35: #{tpu_custom_call.1} parent=1 // pred_check_branch
      %80 = sbr.rel (0) target = $region37
    $region36: #{tpu_custom_call.1} parent=1 // pred_region
      %81 = dma.done [#allocation11], 1024
    $region37: #{tpu_custom_call.1} parent=1 // pred_fallthru
      _
    %v82 = vld [vmem:[#allocation7] sm:$0xff]
    %v83 = vld [vmem:[#allocation7 + $0x8] sm:$0xff]
    %v84 = vld [vmem:[#allocation10] sm:$0xff]
    %v85 = vld [vmem:[#allocation10 + $0x8] sm:$0xff]
    %v86 = vld [vmem:[#allocation10 + $0x10] sm:$0xff]
    %v87 = vld [vmem:[#allocation10 + $0x18] sm:$0xff]
    %v88 = vld [vmem:[#allocation10 + $0x20] sm:$0xff]
    %v89 = vld [vmem:[#allocation10 + $0x28] sm:$0xff]
    %v90 = vld [vmem:[#allocation10 + $0x30] sm:$0xff]
    %v91 = vld [vmem:[#allocation10 + $0x38] sm:$0xff]
    %vm92 = vcmask 261120
    %v94 = vsel %vm92, %v82, 0
    %v97 = vsel %vm92, %v83, 0
    %99 = vmatprep.subr.mxu0 %v85
    %100 = vmatpush1.msra.mxu0 %v84
    %101 = vmatprep.subr.mxu0 %v87
    %102 = vmatpush1.msra.mxu0 %v86
    %103 = vmatprep.subr.mxu0 %v89
    %104 = vmatpush1.msra.mxu0 %v88
    %105 = vmatprep.subr.mxu0 %v91
    %106 = vmatpush1.msra.mxu0 %v90
    %107 = vmatprep.subr.mxu0 0.0
    %108 = vmatpush1.msra.mxu0 0.0
    %109 = vmatprep.subr.mxu0 0.0
    %110 = vmatpush1.msra.mxu0 0.0
    %111 = vmatprep.subr.mxu0 0.0
    %112 = vmatpush1.msra.mxu0 0.0
    %113 = vmatprep.subr.mxu0 0.0
    %114 = vmatpush1.msra.mxu0 0.0
    %115 = vmatprep.subr.mxu0 0.0
    %116 = vmatpush1.msra.mxu0 0.0
    %117 = vmatprep.subr.mxu0 0.0
    %118 = vmatpush1.msra.mxu0 0.0
    %119 = vmatprep.subr.mxu0 0.0
    %120 = vmatpush1.msra.mxu0 0.0
    %121 = vmatprep.subr.mxu0 0.0
    %122 = vmatpush1.msra.mxu0 0.0
    %123 = vmatprep.subr.mxu0 0.0
    %124 = vmatpush1.msra.mxu0 0.0
    %125 = vmatprep.subr.mxu0 0.0
    %126 = vmatpush1.msra.mxu0 0.0
    %127 = vmatprep.subr.mxu0 0.0
    %128 = vmatpush1.msra.mxu0 0.0
    %129 = vmatprep.subr.mxu0 0.0
    %130 = vmatpush1.msra.mxu0 0.0
    %131 = vmatprep.subr.mxu0 0.0
    %132 = vmatpush1.msra.mxu0 0.0
    %133 = vmatprep.subr.mxu0 0.0
    %134 = vmatpush1.msra.mxu0 0.0
    %135 = vmatprep.subr.mxu0 0.0
    %136 = vmatpush1.msra.mxu0 0.0
    %137 = vmatprep.subr.mxu0 0.0
    %138 = vmatpush1.msra.mxu0 0.0
    %139 = vmatprep.subr.mxu0 0.0
    %140 = vmatpush1.msra.mxu0 0.0
    %141 = vmatprep.subr.mxu0 0.0
    %142 = vmatpush1.msra.mxu0 0.0
    %143 = vmatprep.subr.mxu0 0.0
    %144 = vmatpush1.msra.mxu0 0.0
    %145 = vmatprep.subr.mxu0 0.0
    %146 = vmatpush1.msra.mxu0 0.0
    %147 = vmatprep.subr.mxu0 0.0
    %148 = vmatpush1.msra.mxu0 0.0
    %149 = vmatprep.subr.mxu0 0.0
    %150 = vmatpush1.msra.mxu0 0.0
    %151 = vmatprep.subr.mxu0 0.0
    %152 = vmatpush1.msra.mxu0 0.0
    %153 = vmatprep.subr.mxu0 0.0
    %154 = vmatpush1.msra.mxu0 0.0
    %155 = vmatprep.subr.mxu0 0.0
    %156 = vmatpush1.msra.mxu0 0.0
    %157 = vmatprep.subr.mxu0 0.0
    %158 = vmatpush1.msra.mxu0 0.0
    %159 = vmatprep.subr.mxu0 0.0
    %160 = vmatpush1.msra.mxu0 0.0
    %161 = vmatprep.subr.mxu0 0.0
    %162 = vmatpush1.msra.mxu0 0.0
    %163 = vmatprep.mubr.f32.mxu0 0.0
    %164 = vmatmul.mubr.f32.gmra.mrb[0].mxu0 %v94
    %v165 = vpop.f32.mrb[0].mxu0
    %v166 = vadd.f32 0.0, %v165
    %v167 = vpop.f32.mrb[0].mxu0
    %v168 = vadd.f32 0.0, %v167
    %169 = vmatprep.mubr.f32.mxu0 0.0
    %170 = vmatmul.mubr.f32.gmra.mrb[0].mxu0 %v97
    %v171 = vpop.f32.mrb[0].mxu0
    %v172 = vadd.f32 0.0, %v171
    %v173 = vpop.f32.mrb[0].mxu0
    %v174 = vadd.f32 0.0, %v173
    %175 = vdwg.mxu0
    %v176 = vld [vmem:[#allocation4] sm:$0xf]
    %v179 = vunpack.c.l.s4 1966171168
    %v180 = vunpack.c.0.s8 %v179
    %v181 = vlaneseq
    %v182 = vshrl.u32 %v181, 7
    %v183 = vsub.s32 %v180, %v182
    %v184 = vrot.slane %v176, %v183
    %v185 = vcombine.high %v184, %v184
    %v186 = vlaneseq
    %v187 = vshrl.u32 %v186, 7
    %v188 = vsub.s32 0, %v187
    %v189 = vrot.slane %v184, %v188
    %v190 = vlaneseq
    %v191 = vshrl.u32 %v190, 7
    %v192 = vsub.s32 1, %v191
    %v193 = vrot.slane %v184, %v192
    %v194 = vlaneseq
    %v195 = vshrl.u32 %v194, 7
    %v196 = vsub.s32 0, %v195
    %v197 = vrot.slane %v185, %v196
    %v198 = vlaneseq
    %v199 = vshrl.u32 %v198, 7
    %v200 = vsub.s32 1, %v199
    %v201 = vrot.slane %v185, %v200
    %v206 = vadd.f32 %v166, %v189
    %v207 = vadd.f32 %v168, %v193
    %v208 = vadd.f32 %v172, %v197
    %v209 = vadd.f32 %v174, %v201
    %v210 = vtanh.pop %v206
    %v211 = vtanh.pop %v208
    %v212 = vtanh.pop %v207
    %v213 = vtanh.pop %v209
    %v214 = vmul.f32 %v212, 0.5
    %v215 = vmul.f32 %v213, 0.5
    %v216 = vadd.f32 %v214, 0.5
    %v217 = vadd.f32 %v215, 0.5
    %v218 = vmul.f32 %v210, %v216
    %v219 = vmul.f32 %v211, %v217
    %v220 = vld [vmem:[%s5] sm:$0x1]
    %v222 = vlaneseq
    %v223 = vshrl.u32 %v222, 7
    %v224 = vsub.s32 0, %v223
    %v225 = vrot.slane %v220, %v224
    %v227 = vmul.f32 %v218, %v225
    %v228 = vmul.f32 %v219, %v225
    %229 = vadd.xlane.f32.xlu0 %v227
    %v230 = vpop.xlane.xlu0 %229
    %231 = vadd.xlane.f32.xlu0 %v228
    %v232 = vpop.xlane.xlu0 %231
    %s233 = smul.u32 0, 2
    %v234 = vlaneseq
    %v235 = vshrl.u32 %v234, 7
    %vm236 = vcmp.eq.s32.totalorder %v235, 0
    %s237 = sld [smem:[#allocation3 + %s233]]
    %v238 = vstv %s237
    %v239 = vsel %vm236, %v238, 0
    %vm240 = vcmp.eq.s32.totalorder %v235, 1
    %s241 = sadd.s32 %s233, 1
    %s242 = sld [smem:[#allocation3 + %s241]]
    %v243 = vstv %s242
    %v244 = vsel %vm240, %v243, %v239
    %v245 = vlaneseq
    %v246 = vand.u32 %v245, 127
    %vm247 = vcmp.lt.s32.totalorder %v246, %v244
    %v250 = vlaneseq
    %v251 = vshrl.u32 %v250, 7
    %v252 = vsub.s32 %v246, %v251
    %v253 = vrot.slane %v230, %v252
    %v254 = vlaneseq
    %v255 = vshrl.u32 %v254, 7
    %v256 = vsub.s32 %v246, %v255
    %v257 = vrot.slane %v232, %v256
    %vm258 = vcmask 1041409
    %v259 = vsel %vm258, %v257, %v253
    %v261 = vsel %vm247, %v259, -1e+18
    %vm262 = vcmask 58368
    %v263 = vsel %vm262, %v261, -inf
    %264 = vmax.xlane.f32.xlu0 %v263
    %v265 = vpop.xlane.xlu0 %264
    %v266 = vsub.f32 %v261, %v265
    %v267 = vmul.f32 %v266, 1.442695
    %v268 = vpow.pop %v267
    %v269 = vsel %vm262, %v268, 0.0
    %270 = vadd.xlane.f32.xlu0 %v269
    %v271 = vpop.xlane.xlu0 %270
    %v272 = vrcp.pop %v271
    %v273 = vmul.f32 %v271, %v272
    %v274 = vsub.f32 2.0, %v273
    %v275 = vmul.f32 %v272, %v274
    %v276 = vmul.f32 %v268, %v275
    %v279 = vunpack.c.l.s4 1966171168
    %v280 = vunpack.c.0.s8 %v279
    %v281 = vlaneseq
    %v282 = vshrl.u32 %v281, 7
    %v283 = vsub.s32 %v280, %v282
    %v284 = vrot.slane %v276, %v283
    %v285 = vcombine.high %v284, %v284
    %v287 = vunpack.c.l.s4 1966171168
    %v288 = vunpack.c.0.s8 %v287
    %v289 = vlaneseq
    %v290 = vshrl.u32 %v289, 7
    %v291 = vsub.s32 %v288, %v290
    %v292 = vrot.slane %v284, %v291
    %v294 = vunpack.c.l.s4 1966171168
    %v295 = vunpack.c.0.s8 %v294
    %v296 = vlaneseq
    %v297 = vshrl.u32 %v296, 7
    %v298 = vsub.s32 %v295, %v297
    %v299 = vrot.slane %v285, %v298
    %v300 = vld [vmem:[#allocation9] sm:$0xff]
    %v301 = vld [vmem:[#allocation9 + $0x8] sm:$0xff]
    %vm302 = vcmask 64512
    %v303 = vsel %vm302, %v292, 0
    %305 = vmatprep.subr.mxu0 0.0
    %306 = vmatpush1.msra.mxu0 %v300
    %307 = vmatprep.subr.mxu0 0.0
    %308 = vmatpush1.msra.mxu0 0.0
    %309 = vmatprep.subr.mxu0 0.0
    %310 = vmatpush1.msra.mxu0 0.0
    %311 = vmatprep.subr.mxu0 0.0
    %312 = vmatpush1.msra.mxu0 0.0
    %313 = vmatprep.subr.mxu0 0.0
    %314 = vmatpush1.msra.mxu0 0.0
    %315 = vmatprep.subr.mxu0 0.0
    %316 = vmatpush1.msra.mxu0 0.0
    %317 = vmatprep.subr.mxu0 0.0
    %318 = vmatpush1.msra.mxu0 0.0
    %319 = vmatprep.subr.mxu0 0.0
    %320 = vmatpush1.msra.mxu0 0.0
    %321 = vmatprep.subr.mxu0 0.0
    %322 = vmatpush1.msra.mxu0 0.0
    %323 = vmatprep.subr.mxu0 0.0
    %324 = vmatpush1.msra.mxu0 0.0
    %325 = vmatprep.subr.mxu0 0.0
    %326 = vmatpush1.msra.mxu0 0.0
    %327 = vmatprep.subr.mxu0 0.0
    %328 = vmatpush1.msra.mxu0 0.0
    %329 = vmatprep.subr.mxu0 0.0
    %330 = vmatpush1.msra.mxu0 0.0
    %331 = vmatprep.subr.mxu0 0.0
    %332 = vmatpush1.msra.mxu0 0.0
    %333 = vmatprep.subr.mxu0 0.0
    %334 = vmatpush1.msra.mxu0 0.0
    %335 = vmatprep.subr.mxu0 0.0
    %336 = vmatpush1.msra.mxu0 0.0
    %337 = vmatprep.subr.mxu0 0.0
    %338 = vmatpush1.msra.mxu0 0.0
    %339 = vmatprep.subr.mxu0 0.0
    %340 = vmatpush1.msra.mxu0 0.0
    %341 = vmatprep.subr.mxu0 0.0
    %342 = vmatpush1.msra.mxu0 0.0
    %343 = vmatprep.subr.mxu0 0.0
    %344 = vmatpush1.msra.mxu0 0.0
    %345 = vmatprep.subr.mxu0 0.0
    %346 = vmatpush1.msra.mxu0 0.0
    %347 = vmatprep.subr.mxu0 0.0
    %348 = vmatpush1.msra.mxu0 0.0
    %349 = vmatprep.subr.mxu0 0.0
    %350 = vmatpush1.msra.mxu0 0.0
    %351 = vmatprep.subr.mxu0 0.0
    %352 = vmatpush1.msra.mxu0 0.0
    %353 = vmatprep.subr.mxu0 0.0
    %354 = vmatpush1.msra.mxu0 0.0
    %355 = vmatprep.subr.mxu0 0.0
    %356 = vmatpush1.msra.mxu0 0.0
    %357 = vmatprep.subr.mxu0 0.0
    %358 = vmatpush1.msra.mxu0 0.0
    %359 = vmatprep.subr.mxu0 0.0
    %360 = vmatpush1.msra.mxu0 0.0
    %361 = vmatprep.subr.mxu0 0.0
    %362 = vmatpush1.msra.mxu0 0.0
    %363 = vmatprep.subr.mxu0 0.0
    %364 = vmatpush1.msra.mxu0 0.0
    %365 = vmatprep.subr.mxu0 0.0
    %366 = vmatpush1.msra.mxu0 0.0
    %367 = vmatprep.subr.mxu0 0.0
    %368 = vmatpush1.msra.mxu0 0.0
    %369 = vmatprep.mubr.f32.mxu0 0.0
    %370 = vmatmul.mubr.f32.gmra.mrb[0].mxu0 %v303
    %v371 = vpop.f32.mrb[0].mxu0
    %v372 = vadd.f32 0.0, %v371
    %v373 = vpop.f32.mrb[0].mxu0
    %374 = vdwg.mxu0
    %v375 = vsel %vm302, %v299, 0
    %377 = vmatprep.subr.mxu0 0.0
    %378 = vmatpush1.msra.mxu0 %v301
    %379 = vmatprep.subr.mxu0 0.0
    %380 = vmatpush1.msra.mxu0 0.0
    %381 = vmatprep.subr.mxu0 0.0
    %382 = vmatpush1.msra.mxu0 0.0
    %383 = vmatprep.subr.mxu0 0.0
    %384 = vmatpush1.msra.mxu0 0.0
    %385 = vmatprep.subr.mxu0 0.0
    %386 = vmatpush1.msra.mxu0 0.0
    %387 = vmatprep.subr.mxu0 0.0
    %388 = vmatpush1.msra.mxu0 0.0
    %389 = vmatprep.subr.mxu0 0.0
    %390 = vmatpush1.msra.mxu0 0.0
    %391 = vmatprep.subr.mxu0 0.0
    %392 = vmatpush1.msra.mxu0 0.0
    %393 = vmatprep.subr.mxu0 0.0
    %394 = vmatpush1.msra.mxu0 0.0
    %395 = vmatprep.subr.mxu0 0.0
    %396 = vmatpush1.msra.mxu0 0.0
    %397 = vmatprep.subr.mxu0 0.0
    %398 = vmatpush1.msra.mxu0 0.0
    %399 = vmatprep.subr.mxu0 0.0
    %400 = vmatpush1.msra.mxu0 0.0
    %401 = vmatprep.subr.mxu0 0.0
    %402 = vmatpush1.msra.mxu0 0.0
    %403 = vmatprep.subr.mxu0 0.0
    %404 = vmatpush1.msra.mxu0 0.0
    %405 = vmatprep.subr.mxu0 0.0
    %406 = vmatpush1.msra.mxu0 0.0
    %407 = vmatprep.subr.mxu0 0.0
    %408 = vmatpush1.msra.mxu0 0.0
    %409 = vmatprep.subr.mxu0 0.0
    %410 = vmatpush1.msra.mxu0 0.0
    %411 = vmatprep.subr.mxu0 0.0
    %412 = vmatpush1.msra.mxu0 0.0
    %413 = vmatprep.subr.mxu0 0.0
    %414 = vmatpush1.msra.mxu0 0.0
    %415 = vmatprep.subr.mxu0 0.0
    %416 = vmatpush1.msra.mxu0 0.0
    %417 = vmatprep.subr.mxu0 0.0
    %418 = vmatpush1.msra.mxu0 0.0
    %419 = vmatprep.subr.mxu0 0.0
    %420 = vmatpush1.msra.mxu0 0.0
    %421 = vmatprep.subr.mxu0 0.0
    %422 = vmatpush1.msra.mxu0 0.0
    %423 = vmatprep.subr.mxu0 0.0
    %424 = vmatpush1.msra.mxu0 0.0
    %425 = vmatprep.subr.mxu0 0.0
    %426 = vmatpush1.msra.mxu0 0.0
    %427 = vmatprep.subr.mxu0 0.0
    %428 = vmatpush1.msra.mxu0 0.0
    %429 = vmatprep.subr.mxu0 0.0
    %430 = vmatpush1.msra.mxu0 0.0
    %431 = vmatprep.subr.mxu0 0.0
    %432 = vmatpush1.msra.mxu0 0.0
    %433 = vmatprep.subr.mxu0 0.0
    %434 = vmatpush1.msra.mxu0 0.0
    %435 = vmatprep.subr.mxu0 0.0
    %436 = vmatpush1.msra.mxu0 0.0
    %437 = vmatprep.subr.mxu0 0.0
    %438 = vmatpush1.msra.mxu0 0.0
    %439 = vmatprep.subr.mxu0 0.0
    %440 = vmatpush1.msra.mxu0 0.0
    %441 = vmatprep.mubr.f32.mxu0 0.0
    %442 = vmatmul.mubr.f32.gmra.mrb[0].mxu0 %v375
    %v443 = vpop.f32.mrb[0].mxu0
    %v444 = vadd.f32 0.0, %v443
    %v445 = vpop.f32.mrb[0].mxu0
    %446 = vdwg.mxu0
    %447 = vst.msk [vmem:[#allocation12] sm:$0x3] %vm262, %v276
    %v450 = vrot.slane %v444, 7
    %v451 = vsel %vm258, %v450, %v372
    %vm453 = vcmask 254976
    %454 = vst.msk [vmem:[#allocation13] sm:$0x3] %vm453, %v451
    // Predicated region
    $region38: #{tpu_custom_call.1} parent=1 // pred_check
      _
    $region39: #{tpu_custom_call.1} parent=1 // pred_check_branch
      %456 = sbr.rel (0) target = $region41
    $region40: #{tpu_custom_call.1} parent=1 // pred_region
      %s458 = ssub.s32 32, 32
      %459 = vsyncadd [#allocation6], %s458
      %s461 = sshll.u32 [#allocation12], 4
      %s462 = int_to_ptr.vmem [resolvable:$true] %s461
      %464 = dma.vmem_to_hbm [thread:$0]  %s462, 32, %s6, [#allocation6]
    $region41: #{tpu_custom_call.1} parent=1 // pred_fallthru
      _
    // Predicated region
    $region42: #{tpu_custom_call.1} parent=1 // pred_check
      _
    $region43: #{tpu_custom_call.1} parent=1 // pred_check_branch
      %466 = sbr.rel (0) target = $region45
    $region44: #{tpu_custom_call.1} parent=1 // pred_region
      %s468 = ssub.s32 32, 32
      %469 = vsyncadd [#allocation14], %s468
      %s471 = sshll.u32 [#allocation13], 4
      %s472 = int_to_ptr.vmem [resolvable:$true] %s471
      %474 = dma.vmem_to_hbm [thread:$0]  %s472, 32, %s7, [#allocation14]
    $region45: #{tpu_custom_call.1} parent=1 // pred_fallthru
      _
    // Predicated region
    $region46: #{tpu_custom_call.1} parent=1 // pred_check
      _
    $region47: #{tpu_custom_call.1} parent=1 // pred_check_branch
      %476 = sbr.rel (0) target = $region49
    $region48: #{tpu_custom_call.1} parent=1 // pred_region
      %477 = dma.done [#allocation6], 32
    $region49: #{tpu_custom_call.1} parent=1 // pred_fallthru
      _
    // Predicated region
    $region50: #{tpu_custom_call.1} parent=1 // pred_check
      _
    $region51: #{tpu_custom_call.1} parent=1 // pred_check_branch
      %479 = sbr.rel (0) target = $region53
    $region52: #{tpu_custom_call.1} parent=1 // pred_region
      %480 = dma.done [#allocation14], 32
    $region53: #{tpu_custom_call.1} parent=1 // pred_fallthru
      _
    %481 = vsyncpa [#allocation5], 1
    %482 = vsyncpa [#allocation8], 1
    %483 = vsyncpa [#allocation11], 1
    %484 = vsyncpa [#allocation6], 1
    %485 = vsyncpa [#allocation14], 1

</llo_original>
